<compile_context>
chip_gen: v7x
topology: tpu7x:2x2x1
jax: 0.10.0
libtpu: 0.0.40
codegen_flags: <defaults>
</compile_context>

<pallas_src>
import jax
import jax.numpy as jnp
from jax.experimental import pallas as pl
from jax.experimental.pallas import tpu as pltpu

_LANES = 128


def _cdiv(a, b):
    return -(-a // b)


def _tpu_config():
    """Return (num_tensorcores, per-step VMEM working-set budget in bytes)."""
    try:
        kind = jax.devices()[0].device_kind.lower()
    except Exception:
        kind = ""
    if "v7" in kind or "tpu7" in kind:
        # 2 TensorCores / chip, 3.2 TB/s HBM: use big tiles to amortize the
        # ~0.35 us fixed per-grid-step cost. Budget stays under the 32 MiB
        # scoped VMEM (64 MiB physical).
        return 2, 24 * 1024 * 1024
    if "v6" in kind:
        return 1, 24 * 1024 * 1024          # 32 MiB scoped default
    # v5e / unknown: 16 MiB scoped default -> stay conservative.
    return 1, 12 * 1024 * 1024


def _sse_partials(yh2, yy2, *, rows, tile_rows, acc_rows, num_cores, steps,
                  total_blocks, dimension_semantics, vmem_limit_bytes):
    """Streaming sum((yhat-y)^2) folded into a (num_cores*acc_rows, 128) f32 slab."""

    def kernel(yhat_ref, y_ref, out_ref):
        c = pl.program_id(0)          # TensorCore axis
        i = pl.program_id(1)          # streaming / reduction axis

        @pl.when(i == 0)
        def _init():
            out_ref[...] = jnp.zeros_like(out_ref)

        d = yhat_ref[...].astype(jnp.float32) - y_ref[...].astype(jnp.float32)
        sq = d * d

        # Logical block position and its number of valid rows. rows / steps /
        # tile_rows are Python ints baked in at trace time (no SMEM read).
        p = c * steps + i
        valid = rows - p * tile_rows

        @pl.when(valid >= tile_rows)              # interior block: no masking
        def _full():
            out_ref[...] += jnp.sum(sq.reshape(-1, acc_rows, _LANES), axis=0)

        @pl.when(valid < tile_rows)               # ragged tail / redundant block
        def _tail():
            rid = jax.lax.broadcasted_iota(jnp.int32, (tile_rows, _LANES), 0)
            msq = jnp.where(rid < valid, sq, 0.0)
            out_ref[...] += jnp.sum(msq.reshape(-1, acc_rows, _LANES), axis=0)

    if num_cores * steps == total_blocks:
        in_map = lambda c, i: (c * steps + i, 0)
    else:
        # At most one redundant trailing block on the last core: clamp its block
        # index in-bounds; the kernel masks it to a zero contribution.
        last_block = total_blocks - 1
        in_map = lambda c, i: (jnp.minimum(c * steps + i, last_block), 0)

    return pl.pallas_call(
        kernel,
        out_shape=jax.ShapeDtypeStruct((num_cores * acc_rows, _LANES), jnp.float32),
        grid=(num_cores, steps),
        in_specs=[pl.BlockSpec((tile_rows, _LANES), in_map),
                  pl.BlockSpec((tile_rows, _LANES), in_map)],
        out_specs=pl.BlockSpec((acc_rows, _LANES), lambda c, i: (c, 0)),
        compiler_params=pltpu.CompilerParams(
            dimension_semantics=dimension_semantics,
            vmem_limit_bytes=vmem_limit_bytes),
    )(yh2, yy2)


def rmse_loss(yhat, y, *, max_tile_rows=None):
    assert yhat.shape == y.shape, "yhat and y must have the same shape"
    n = int(yhat.size)
    assert n > 0, "empty input"

    yh = yhat.reshape(-1)
    yy = y.reshape(-1)

    # Zero-copy when n is a multiple of 8*128 (the reshape below is a bitcast).
    # Otherwise pad by < 1024 zeros (zeros contribute 0 to the SSE; the mean
    # divisor uses the true n).
    # TODO(synk): a fully copy-free path for n % 1024 != 0 would need 1-D
    # blocks or manual ragged-tail DMA; Mosaic 1-D reshape support is fragile,
    # so we accept one minimal pad copy in that case only.
    pad = (-n) % (8 * _LANES)
    if pad:
        yh = jnp.pad(yh, (0, pad))
        yy = jnp.pad(yy, (0, pad))
    rows = (n + pad) // _LANES                      # multiple of 8

    num_cores, vmem_budget = _tpu_config()
    itemsize = max(jnp.dtype(yhat.dtype).itemsize, jnp.dtype(y.dtype).itemsize)

    # Wide fold accumulator: 4 (8,128) vreg rows -> independent add chains.
    acc_rows = 32 if rows >= 32 else 8

    # Tile sized by VMEM working set: 2 inputs x 2 pipeline buffers in the
    # native dtype plus ~3 f32 tile-sized temporaries (diff/square/mask).
    per_row_bytes = 4 * _LANES * itemsize + 3 * _LANES * 4
    if max_tile_rows is None:
        max_tile_rows = vmem_budget // per_row_bytes
    max_tile_rows = max(acc_rows, (int(max_tile_rows) // acc_rows) * acc_rows)

    # tile_rows: multiple of acc_rows, never larger than the array itself.
    tile_rows = min(max_tile_rows, (rows // acc_rows) * acc_rows)
    total_blocks = _cdiv(rows, tile_rows)
    if total_blocks < num_cores:                    # too small to split
        num_cores = 1
    steps = _cdiv(total_blocks, num_cores)

    if num_cores > 1 and hasattr(pltpu, "CORE_PARALLEL"):
        dims = (pltpu.CORE_PARALLEL, pltpu.ARBITRARY)   # real 2-TC split on v7x
    else:
        num_cores = 1
        steps = total_blocks
        dims = ("arbitrary", "arbitrary")

    vmem_limit_bytes = int(min(32 * 1024 * 1024,
                               max(16 * 1024 * 1024, vmem_budget + (8 << 20))))

    yh2 = yh.reshape(rows, _LANES)
    yy2 = yy.reshape(rows, _LANES)

    common = dict(rows=rows, tile_rows=tile_rows, acc_rows=acc_rows,
                  total_blocks=total_blocks, vmem_limit_bytes=vmem_limit_bytes)
    try:
        partials = _sse_partials(yh2, yy2, num_cores=num_cores, steps=steps,
                                 dimension_semantics=dims, **common)
    except Exception:
        if num_cores == 1:
            raise
        # Safety net: if this build rejects the multi-TensorCore grid axis,
        # fall back to the (always-valid) single-core schedule.
        partials = _sse_partials(yh2, yy2, num_cores=1, steps=total_blocks,
                                 dimension_semantics=("arbitrary", "arbitrary"),
                                 **common)

    sse = jnp.sum(partials)                     # single tiny cross-lane reduce
    return jnp.sqrt(sse / jnp.float32(n))       # mean uses the TRUE count


def rmse_loss_ref(yhat, y):
    d = yhat.astype(jnp.float32) - y.astype(jnp.float32)
    return jnp.sqrt(jnp.mean(d * d))


if __name__ == "__main__":
    key = jax.random.PRNGKey(0)
    k1, k2, k3, k4, k5, k6 = jax.random.split(key, 6)

    checks = []

    # 1) Aligned case (zero-copy path, single exact block): batch=2, seq=8, feat=128.
    shape1 = (2, 8, 128)
    y1 = jax.random.normal(k1, shape1, dtype=jnp.float32)
    p1 = y1 + 0.1 * jax.random.normal(k2, shape1, dtype=jnp.float32)
    checks.append(("aligned", rmse_loss(p1, y1), rmse_loss_ref(p1, y1)))

    # 2) Ragged element count (minimal-pad path): batch=3, seq=7, feat=50.
    shape2 = (3, 7, 50)
    y2 = jax.random.normal(k3, shape2, dtype=jnp.float32)
    p2 = y2 + 0.05 * jax.random.normal(k4, shape2, dtype=jnp.float32)
    checks.append(("ragged", rmse_loss(p2, y2), rmse_loss_ref(p2, y2)))

    # 3) Multi-step streaming + in-kernel tail masking (force small tiles):
    #    batch=2, seq=100, feat=128 -> 200 rows, tile_rows=64, last block partial.
    shape3 = (2, 100, 128)
    y3 = jax.random.normal(k5, shape3, dtype=jnp.float32)
    p3 = y3 + 0.2 * jax.random.normal(k6, shape3, dtype=jnp.float32)
    checks.append(("multistep", rmse_loss(p3, y3, max_tile_rows=64),
                   rmse_loss_ref(p3, y3)))

    for name, out, ref in checks:
        out = jax.block_until_ready(out)
        if not jnp.allclose(out, ref, rtol=1e-4, atol=1e-6):
            raise AssertionError(f"mismatch ({name}): kernel={out} ref={ref}")

    print("KERNEL_OK")
</pallas_src>

<mosaic_0001>
module attributes {stable_mosaic.version = 11 : i64} {
  func.func @kernel(%arg0: i32, %arg1: i32, %arg2: memref<16x128xf32, #tpu.memory_space<vmem>>, %arg3: memref<16x128xf32, #tpu.memory_space<vmem>>, %arg4: memref<8x128xf32, #tpu.memory_space<vmem>>) attributes {dimension_semantics = [#tpu.dimension_semantics<arbitrary>, #tpu.dimension_semantics<arbitrary>], iteration_bounds = array<i64: 1, 1>, scalar_prefetch = 0 : i64, scratch_operands = 0 : i64, tpu.core_type = #tpu.core_type<tc>, window_params = [{transform_indices = @transform_0, window_bounds = array<i64: 16, 128>}, {transform_indices = @transform_1, window_bounds = array<i64: 16, 128>}, {transform_indices = @transform_2, window_bounds = array<i64: 8, 128>}]} {
    %c0_i32 = arith.constant 0 : i32
    %0 = arith.cmpi eq, %arg1, %c0_i32 : i32
    %1 = arith.extui %0 : i1 to i32
    %c0_i32_0 = arith.constant 0 : i32
    %2 = arith.cmpi ne, %1, %c0_i32_0 : i32
    scf.if %2 {
      %cst = arith.constant 0.000000e+00 : f32
      %17 = vector.broadcast %cst : f32 to vector<8x128xf32>
      %c0_9 = arith.constant 0 : index
      %c0_10 = arith.constant 0 : index
      %18 = vector.load %arg4[%c0_9, %c0_10] : memref<8x128xf32, #tpu.memory_space<vmem>>, vector<8x128xf32>
      tpu.vector_store %arg4[%c0_9, %c0_10], %17 {strides = array<i32>} : memref<8x128xf32, #tpu.memory_space<vmem>>, vector<8x128xf32>,
    } else {
    }
    %c0 = arith.constant 0 : index
    %c0_1 = arith.constant 0 : index
    %3 = vector.load %arg2[%c0, %c0_1] : memref<16x128xf32, #tpu.memory_space<vmem>>, vector<16x128xf32>
    %c0_2 = arith.constant 0 : index
    %c0_3 = arith.constant 0 : index
    %4 = vector.load %arg3[%c0_2, %c0_3] : memref<16x128xf32, #tpu.memory_space<vmem>>, vector<16x128xf32>
    %5 = arith.subf %3, %4 : vector<16x128xf32>
    %6 = arith.mulf %5, %5 : vector<16x128xf32>
    %c1_i32 = arith.constant 1 : i32
    %7 = arith.muli %arg0, %c1_i32 : i32
    %8 = arith.addi %7, %arg1 : i32
    %c16_i32 = arith.constant 16 : i32
    %9 = arith.muli %8, %c16_i32 : i32
    %c16_i32_4 = arith.constant 16 : i32
    %10 = arith.subi %c16_i32_4, %9 : i32
    %c16_i32_5 = arith.constant 16 : i32
    %11 = arith.cmpi sge, %10, %c16_i32_5 : i32
    %12 = arith.extui %11 : i1 to i32
    %c0_i32_6 = arith.constant 0 : i32
    %13 = arith.cmpi ne, %12, %c0_i32_6 : i32
    scf.if %13 {
      %c0_9 = arith.constant 0 : index
      %c0_10 = arith.constant 0 : index
      %17 = vector.load %arg4[%c0_9, %c0_10] : memref<8x128xf32, #tpu.memory_space<vmem>>, vector<8x128xf32>
      %18 = vector.shape_cast %6 : vector<16x128xf32> to vector<2x8x128xf32>
      %cst = arith.constant dense<0.000000e+00> : vector<8x128xf32>
      %19 = vector.multi_reduction <add>, %18, %cst [0] : vector<2x8x128xf32> to vector<8x128xf32>
      %20 = arith.addf %17, %19 : vector<8x128xf32>
      %c0_11 = arith.constant 0 : index
      %c0_12 = arith.constant 0 : index
      %21 = vector.load %arg4[%c0_11, %c0_12] : memref<8x128xf32, #tpu.memory_space<vmem>>, vector<8x128xf32>
      tpu.vector_store %arg4[%c0_11, %c0_12], %20 {strides = array<i32>} : memref<8x128xf32, #tpu.memory_space<vmem>>, vector<8x128xf32>,
    } else {
    }
    %c16_i32_7 = arith.constant 16 : i32
    %14 = arith.cmpi slt, %10, %c16_i32_7 : i32
    %15 = arith.extui %14 : i1 to i32
    %c0_i32_8 = arith.constant 0 : i32
    %16 = arith.cmpi ne, %15, %c0_i32_8 : i32
    scf.if %16 {
      %17 = tpu.iota {dimensions = array<i32: 0>} : vector<16x128xi32>
      %18 = vector.broadcast %10 : i32 to vector<16x128xi32>
      %19 = arith.cmpi slt, %17, %18 : vector<16x128xi32>
      %cst = arith.constant 0.000000e+00 : f32
      %20 = vector.broadcast %cst : f32 to vector<16x128xf32>
      %21 = arith.select %19, %6, %20 : vector<16x128xi1>, vector<16x128xf32>
      %c0_9 = arith.constant 0 : index
      %c0_10 = arith.constant 0 : index
      %22 = vector.load %arg4[%c0_9, %c0_10] : memref<8x128xf32, #tpu.memory_space<vmem>>, vector<8x128xf32>
      %23 = vector.shape_cast %21 : vector<16x128xf32> to vector<2x8x128xf32>
      %cst_11 = arith.constant dense<0.000000e+00> : vector<8x128xf32>
      %24 = vector.multi_reduction <add>, %23, %cst_11 [0] : vector<2x8x128xf32> to vector<8x128xf32>
      %25 = arith.addf %22, %24 : vector<8x128xf32>
      %c0_12 = arith.constant 0 : index
      %c0_13 = arith.constant 0 : index
      %26 = vector.load %arg4[%c0_12, %c0_13] : memref<8x128xf32, #tpu.memory_space<vmem>>, vector<8x128xf32>
      tpu.vector_store %arg4[%c0_12, %c0_13], %25 {strides = array<i32>} : memref<8x128xf32, #tpu.memory_space<vmem>>, vector<8x128xf32>,
    } else {
    }
    return
  }
  func.func @transform_0(%arg0: i32, %arg1: i32) -> (i32, i32) {
    %c1_i32 = arith.constant 1 : i32
    %0 = arith.muli %arg0, %c1_i32 : i32
    %1 = arith.addi %0, %arg1 : i32
    %c0_i32 = arith.constant 0 : i32
    %c0_i32_0 = arith.constant 0 : i32
    return %1, %c0_i32 : i32, i32
  }
  func.func @transform_1(%arg0: i32, %arg1: i32) -> (i32, i32) {
    %c1_i32 = arith.constant 1 : i32
    %0 = arith.muli %arg0, %c1_i32 : i32
    %1 = arith.addi %0, %arg1 : i32
    %c0_i32 = arith.constant 0 : i32
    %c0_i32_0 = arith.constant 0 : i32
    return %1, %c0_i32 : i32, i32
  }
  func.func @transform_2(%arg0: i32, %arg1: i32) -> (i32, i32) {
    %c0_i32 = arith.constant 0 : i32
    %c0_i32_0 = arith.constant 0 : i32
    return %arg0, %c0_i32 : i32, i32
  }
}

</mosaic_0001>

<llo_original>
// kernel: tpu_custom_call.1
$region0: #{tpu_custom_call.1}
  #allocation0 [shape = 'u32[]', space=smem, size = 0x4, offset = 0x4, fixed_abs, tag = 'smem constant byte address 0x4 - core index']
  #allocation1 [shape = 'u32[144,128]{1,0:T(1,128)}', space=vmem, size = 0x12000, scoped, tag = 'internal scratch']
  %s0 = inlined_call_operand.hbm [shape: f32[16,128], index: 0, kind: input, shape index: {}]
  %s1 = inlined_call_operand.hbm [shape: f32[16,128], index: 1, kind: input, shape index: {}]
  %s2 = inlined_call_operand.hbm [shape: f32[8,128], index: 2, kind: output, shape index: {}]
  %s3 = sld [smem:[#allocation0]]
  $region38: #{tpu_custom_call.1} parent=0
    _
  %s5 = ssub.s32 1, %s3
  %s6 = scalar_select 0, %s5, %s3
  $region1: #{tpu_custom_call.1} parent=0
    #allocation2 [shape = 'u8[8192]{0}', space=vmem, size = 0x2000, scoped, tag = 'input window, operand 0, single buffered']
    #allocation3 [shape = 's32[1]{0}', space=sflag, size = 0x4, scoped, tag = 'scoped memory for tpu_custom_call.1']
    #allocation4 [shape = 's32[1]{0}', space=sflag, size = 0x4, scoped, tag = 'scoped memory for tpu_custom_call.1']
    #allocation5 [shape = 'u8[8192]{0}', space=vmem, size = 0x2000, scoped, tag = 'input window, operand 1, single buffered']
    #allocation6 [shape = 's32[1]{0}', space=sflag, size = 0x4, scoped, tag = 'scoped memory for tpu_custom_call.1']
    #allocation7 [shape = 'u8[4096]{0}', space=vmem, size = 0x1000, scoped, tag = 'output window, operand 0, single buffered']
    %7 = vsyncpa [#allocation3], 0
    %8 = vsyncpa [#allocation6], 0
    %9 = vsyncpa [#allocation4], 0
    // Predicated region
    $region2: #{tpu_custom_call.1} parent=1 // pred_check
      _
    $region3: #{tpu_custom_call.1} parent=1 // pred_check_branch
      %11 = sbr.rel (0) target = $region5
    $region4: #{tpu_custom_call.1} parent=1 // pred_region
      %s12 = sadd.s32 0, 0
      %s13 = smul.u32 2, %s12
      %s15 = ssub.s32 256, 256
      %16 = vsyncadd [#allocation3], %s15
      %s17 = smul.addr %s13, 128
      %s18 = scalar_lea.hbm %s0, %s17
      %s19 = sshll.u32 [#allocation2], 4
      %s20 = int_to_ptr.vmem [resolvable:$true] %s19
      %25 = dma.hbm_to_vmem [thread:$0]  %s18, 256, %s20, [#allocation3], 128, 128, 8
    $region5: #{tpu_custom_call.1} parent=1 // pred_fallthru
      _
    // Predicated region
    $region6: #{tpu_custom_call.1} parent=1 // pred_check
      _
    $region7: #{tpu_custom_call.1} parent=1 // pred_check_branch
      %27 = sbr.rel (0) target = $region9
    $region8: #{tpu_custom_call.1} parent=1 // pred_region
      %s28 = sadd.s32 0, 0
      %s29 = smul.u32 2, %s28
      %s31 = ssub.s32 256, 256
      %32 = vsyncadd [#allocation6], %s31
      %s33 = smul.addr %s29, 128
      %s34 = scalar_lea.hbm %s1, %s33
      %s35 = sshll.u32 [#allocation5], 4
      %s36 = int_to_ptr.vmem [resolvable:$true] %s35
      %41 = dma.hbm_to_vmem [thread:$0]  %s34, 256, %s36, [#allocation6], 128, 128, 8
    $region9: #{tpu_custom_call.1} parent=1 // pred_fallthru
      _
    // Predicated region
    $region10: #{tpu_custom_call.1} parent=1 // pred_check
      _
    $region11: #{tpu_custom_call.1} parent=1 // pred_check_branch
      %43 = sbr.rel (0) target = $region13
    $region12: #{tpu_custom_call.1} parent=1 // pred_region
      %44 = dma.done [#allocation3], 256
    $region13: #{tpu_custom_call.1} parent=1 // pred_fallthru
      _
    // Predicated region
    $region14: #{tpu_custom_call.1} parent=1 // pred_check
      _
    $region15: #{tpu_custom_call.1} parent=1 // pred_check_branch
      %46 = sbr.rel (0) target = $region17
    $region16: #{tpu_custom_call.1} parent=1 // pred_region
      %47 = dma.done [#allocation6], 256
    $region17: #{tpu_custom_call.1} parent=1 // pred_fallthru
      _
    %s48 = sadd.s32 0, 0
    %s49 = smul.u32 2, %s48
    %s50 = sadd.s32 0, 0
    %s51 = smul.u32 2, %s50
    %p52 = scmp.eq.s32.totalorder 0, 0
    // Predicated region
    $region18: #{tpu_custom_call.1} parent=1 // pred_check
      %p53 = pneg %p52
    $region19: #{tpu_custom_call.1} parent=1 // pred_check_branch
      %55 = sbr.rel (%p53) target = $region21
    $region20: #{tpu_custom_call.1} parent=1 // pred_region
      %56 = vst [vmem:[#allocation7] sm:$0xff] 0.0
    $region21: #{tpu_custom_call.1} parent=1 // pred_fallthru
      _
    %v57 = vld [vmem:[#allocation2] sm:$0xff]
    %v58 = vld [vmem:[#allocation2 + $0x8] sm:$0xff]
    %v59 = vld [vmem:[#allocation5] sm:$0xff]
    %v60 = vld [vmem:[#allocation5 + $0x8] sm:$0xff]
    %v61 = vsub.f32 %v57, %v59
    %v62 = vsub.f32 %v58, %v60
    %v63 = vmul.f32 %v61, %v61
    %v64 = vmul.f32 %v62, %v62
    %s65 = sadd.s32 0, 0
    %s66 = smul.u32 %s65, 16
    %s67 = ssub.s32 16, %s66
    %p68 = scmp.ge.s32.totalorder %s67, 16
    // Predicated region
    $region22: #{tpu_custom_call.1} parent=1 // pred_check
      %p69 = pneg %p68
    $region23: #{tpu_custom_call.1} parent=1 // pred_check_branch
      %71 = sbr.rel (%p69) target = $region25
    $region24: #{tpu_custom_call.1} parent=1 // pred_region
      %v72 = vld [vmem:[#allocation7] sm:$0xff]
      %v73 = vadd.f32 %v63, %v64
      %v74 = vadd.f32 %v72, %v73
      %75 = vst [vmem:[#allocation7] sm:$0xff] %v74
    $region25: #{tpu_custom_call.1} parent=1 // pred_fallthru
      _
    %p76 = scmp.lt.s32.totalorder %s67, 16
    // Predicated region
    $region26: #{tpu_custom_call.1} parent=1 // pred_check
      %p77 = pneg %p76
    $region27: #{tpu_custom_call.1} parent=1 // pred_check_branch
      %79 = sbr.rel (%p77) target = $region29
    $region28: #{tpu_custom_call.1} parent=1 // pred_region
      %v80 = vlaneseq
      %v81 = vshrl.u32 %v80, 7
      %v82 = vadd.s32 %v81, 8
      %v83 = vstv %s67
      %vm84 = vcmp.lt.s32.totalorder %v81, %v83
      %vm85 = vcmp.lt.s32.totalorder %v82, %v83
      %v86 = vsel %vm84, %v63, 0.0
      %v87 = vsel %vm85, %v64, 0.0
      %v88 = vld [vmem:[#allocation7] sm:$0xff]
      %v89 = vadd.f32 %v86, %v87
      %v90 = vadd.f32 %v88, %v89
      %91 = vst [vmem:[#allocation7] sm:$0xff] %v90
    $region29: #{tpu_custom_call.1} parent=1 // pred_fallthru
      _
    // Predicated region
    $region30: #{tpu_custom_call.1} parent=1 // pred_check
      _
    $region31: #{tpu_custom_call.1} parent=1 // pred_check_branch
      %93 = sbr.rel (0) target = $region33
    $region32: #{tpu_custom_call.1} parent=1 // pred_region
      %s95 = ssub.s32 128, 128
      %96 = vsyncadd [#allocation4], %s95
      %s98 = sshll.u32 [#allocation7], 4
      %s99 = int_to_ptr.vmem [resolvable:$true] %s98
      %101 = dma.vmem_to_hbm [thread:$0]  %s99, 128, %s2, [#allocation4]
    $region33: #{tpu_custom_call.1} parent=1 // pred_fallthru
      _
    // Predicated region
    $region34: #{tpu_custom_call.1} parent=1 // pred_check
      _
    $region35: #{tpu_custom_call.1} parent=1 // pred_check_branch
      %103 = sbr.rel (0) target = $region37
    $region36: #{tpu_custom_call.1} parent=1 // pred_region
      %104 = dma.done [#allocation4], 128
    $region37: #{tpu_custom_call.1} parent=1 // pred_fallthru
      _
    %105 = vsyncpa [#allocation3], 1
    %106 = vsyncpa [#allocation6], 1
    %107 = vsyncpa [#allocation4], 1

</llo_original>
